<compile_context>
chip_gen: v7x
topology: tpu7x:2x2x1
jax: 0.10.0
libtpu: 0.0.40
codegen_flags: <defaults>
</compile_context>

<pallas_src>
import jax
import jax.numpy as jnp
from jax import lax
from jax.experimental import pallas as pl
from jax.experimental.pallas import tpu as pltpu

_LANES = 128
_SUBLANES = 8
_SUB_ROWS = 512        # inner streaming sub-block: 512*128*4B = 256 KiB f32 temps
_TARGET_ROWS = 8192    # ~4 MiB f32 per input block per pipeline buffer


def _round_up(n, m):
    return ((n + m - 1) // m) * m


def _pick_sub_rows(chunk_rows):
    """Largest multiple of 8 that divides chunk_rows and is <= _SUB_ROWS."""
    best = _SUBLANES
    cap = min(_SUB_ROWS, chunk_rows)
    d = _SUBLANES
    while d <= cap:
        if chunk_rows % d == 0:
            best = d
        d += _SUBLANES
    return best


def _make_kernel(chunk_rows, sub_rows, num_sub, rows_total, chunks_per_split,
                 needs_mask):
    def kernel(scale_ref, x_ref, y_ref, out_ref):
        b = pl.program_id(0)
        s = pl.program_id(1)
        cc = pl.program_id(2)

        @pl.when(cc == 0)
        def _():
            out_ref[...] = jnp.zeros_like(out_ref)

        scale = scale_ref[b]  # f32 scalar: -1 / (2 * sigma_b^2), finite (eps-clamped)

        if needs_mask:
            # First global row covered by this *logical* (unclamped) chunk; rows at
            # or beyond rows_total are garbage (partial block) or a duplicated
            # clamped chunk and must contribute 0.
            row0 = (s * chunks_per_split + cc) * chunk_rows
        else:
            row0 = 0  # unused

        def body(i, acc):
            r = pl.multiple_of(i * sub_rows, sub_rows)
            xs = x_ref[0, pl.ds(r, sub_rows), :].astype(jnp.float32)
            ys = y_ref[0, pl.ds(r, sub_rows), :].astype(jnp.float32)
            diff = xs - ys
            if needs_mask:
                rid = lax.broadcasted_iota(jnp.int32, (sub_rows, 1), 0)
                diff = jnp.where(row0 + r + rid < rows_total, diff, 0.0)
            term = jnp.abs(diff) * (1.0 - jnp.exp(diff * diff * scale))
            # Fold down to one (8,128) vreg with cheap VPU adds (no XLU reduce).
            return acc + jnp.sum(
                term.reshape(sub_rows // _SUBLANES, _SUBLANES, _LANES), axis=0)

        acc = lax.fori_loop(0, num_sub, body,
                            jnp.zeros((_SUBLANES, _LANES), jnp.float32))
        out_ref[...] += acc[None, None]

    return kernel


def noise_invariant_l1(x, y, sigma=None, *, target_rows=_TARGET_ROWS):
    """Pallas equivalent of NoiseInvariantL1()(X, Y, sigma) -> scalar mean loss.

    x, y: float arrays (f32 or bf16) of shape (B, C, H, W), NCHW.
    """
    assert x.shape == y.shape and x.ndim == 4
    B, C, H, W = x.shape
    n_elems = B * C * H * W

    # --- sigma / hoisted scale (tiny; computed in XLA outside the data stream) ---
    if sigma is None:
        h_crop, w_crop = min(H, 50), min(W, 50)
        region = y[:, :, :h_crop, :w_crop].astype(jnp.float32)
        sigma_b = jnp.std(region, axis=(1, 2, 3), ddof=1)  # unbiased, like torch.std
    else:
        sigma_b = jnp.broadcast_to(jnp.asarray(sigma, jnp.float32), (B,))
    # eps-clamp: sigma -> 0 would give scale = -inf and exp(0 * -inf) = NaN.
    scale = (-0.5) / jnp.maximum(sigma_b * sigma_b, 1e-12)

    # --- lane-dense (B, rows, 128) layout + chunking -----------------------------
    N = C * H * W
    rows = -(-N // _LANES)

    num_chunks = max(1, -(-rows // max(int(target_rows), _SUBLANES)))
    if num_chunks == 1:
        chunk_rows = _round_up(rows, _SUBLANES)  # minimal slack -> minimal/no pad
    else:
        chunk_rows = -(-rows // num_chunks)
        chunk_rows = _round_up(chunk_rows,
                               _SUB_ROWS if chunk_rows > _SUB_ROWS else _SUBLANES)
        num_chunks = -(-rows // chunk_rows)      # last-chunk slack is masked, not padded
    sub_rows = _pick_sub_rows(chunk_rows)
    num_sub = chunk_rows // sub_rows

    padded_rows = max(rows, chunk_rows)
    pad = padded_rows * _LANES - N
    xf = x.reshape(B, N)
    yf = y.reshape(B, N)
    if pad:
        # TODO(synk): this pad materializes one copy of X and Y; it only triggers when
        # C*H*W is not a multiple of 128 (lane remainder) or in the small single-chunk
        # rows%8!=0 corner — a lane-dense layout cannot avoid it. Padding (X==Y==0)
        # contributes exactly 0 to the sum.
        xf = jnp.pad(xf, ((0, 0), (0, pad)))
        yf = jnp.pad(yf, ((0, 0), (0, pad)))
    x3 = xf.reshape(B, padded_rows, _LANES)
    y3 = yf.reshape(B, padded_rows, _LANES)

    # Split the reduction axis into two parallel halves so both v7x TensorCores
    # stream even when B == 1 / odd; 1-TC chips just see a reordered grid.
    nsplit = 2 if num_chunks >= 2 else 1
    chunks_per_split = -(-num_chunks // nsplit)
    needs_mask = (num_chunks * chunk_rows != padded_rows) or (
        nsplit * chunks_per_split != num_chunks)

    last_chunk = num_chunks - 1

    def in_map(b, s, cc):
        chunk = s * chunks_per_split + cc
        # Clamp a possibly-duplicated final chunk of the second split into bounds;
        # the kernel fully masks it via the logical row index.
        return (b, jnp.minimum(chunk, last_chunk), 0)

    kernel = _make_kernel(chunk_rows, sub_rows, num_sub, padded_rows,
                          chunks_per_split, needs_mask)

    bytes_in = int(x3.size) * x3.dtype.itemsize + int(y3.size) * y3.dtype.itemsize
    cost = pl.CostEstimate(
        flops=7 * B * N,
        transcendentals=B * N,
        bytes_accessed=bytes_in + B * nsplit * _SUBLANES * _LANES * 4,
    )

    # 2 inputs x 2 pipeline buffers x block + ~8 MiB headroom (loop temps, output,
    # compiler scratch). Max ~24 MiB for f32 8192-row blocks: safe on v5e/v6e/v7x.
    in_block_bytes = chunk_rows * _LANES * (x3.dtype.itemsize + y3.dtype.itemsize)
    vmem_limit = int(min(64 * 2**20, max(16 * 2**20, 2 * in_block_bytes + 8 * 2**20)))

    partials = pl.pallas_call(
        kernel,
        out_shape=jax.ShapeDtypeStruct((B, nsplit, _SUBLANES, _LANES), jnp.float32),
        grid_spec=pltpu.PrefetchScalarGridSpec(
            num_scalar_prefetch=0,
            grid=(B, nsplit, chunks_per_split),
            in_specs=[
                pl.BlockSpec(memory_space=pltpu.MemorySpace.SMEM),  # per-batch scale
                pl.BlockSpec((1, chunk_rows, _LANES), in_map),
                pl.BlockSpec((1, chunk_rows, _LANES), in_map),
            ],
            out_specs=pl.BlockSpec((1, 1, _SUBLANES, _LANES),
                                   lambda b, s, cc: (b, s, 0, 0)),
        ),
        compiler_params=pltpu.CompilerParams(
            dimension_semantics=("parallel", "parallel", "arbitrary"),
            vmem_limit_bytes=vmem_limit,
        ),
        cost_estimate=cost,
    )(scale, x3, y3)

    # torch.mean over the whole (unpadded) loss tensor.
    return jnp.sum(partials) / n_elems


if __name__ == "__main__":
    def _ref_loss(x, y):
        h, w = min(x.shape[2], 50), min(x.shape[3], 50)
        sigma = jnp.std(y[:, :, :h, :w].astype(jnp.float32),
                        axis=(1, 2, 3), keepdims=True, ddof=1)
        d = x.astype(jnp.float32) - y.astype(jnp.float32)
        return jnp.mean(jnp.abs(d) * (1.0 - jnp.exp(-(d ** 2) / (2.0 * sigma ** 2))))

    key = jax.random.PRNGKey(0)
    cases = [
        ((2, 4, 16, 16), {}),                   # aligned N, single chunk
        ((1, 3, 20, 20), {}),                   # lane-unaligned N -> small pad path, B=1
        ((1, 4, 32, 40), {"target_rows": 16}),  # multi-chunk, 2-way TC split, ragged mask
    ]
    for shape, kwargs in cases:
        key, kx, ky = jax.random.split(key, 3)
        x = jax.random.normal(kx, shape, dtype=jnp.float32)
        y = x + 0.1 * jax.random.normal(ky, shape, dtype=jnp.float32)
        loss = noise_invariant_l1(x, y, **kwargs)
        loss = jax.block_until_ready(loss)
        ref = _ref_loss(x, y)
        assert jnp.allclose(loss, ref, rtol=1e-4, atol=1e-6), (shape, float(loss), float(ref))

    print("KERNEL_OK")
</pallas_src>

<mosaic_0001>
module attributes {stable_mosaic.version = 11 : i64} {
  func.func @kernel(%arg0: i32, %arg1: i32, %arg2: i32, %arg3: memref<2xf32, #tpu.memory_space<smem>>, %arg4: memref<1x8x128xf32, #tpu.memory_space<vmem>>, %arg5: memref<1x8x128xf32, #tpu.memory_space<vmem>>, %arg6: memref<1x1x8x128xf32, #tpu.memory_space<vmem>>) attributes {dimension_semantics = [#tpu.dimension_semantics<parallel>, #tpu.dimension_semantics<parallel>, #tpu.dimension_semantics<arbitrary>], iteration_bounds = array<i64: 2, 1, 1>, scalar_prefetch = 0 : i64, scratch_operands = 0 : i64, tpu.core_type = #tpu.core_type<tc>, window_params = [{transform_indices = @transform_0, window_bounds = array<i64: 2>}, {transform_indices = @transform_1, window_bounds = array<i64: 1, 8, 128>}, {transform_indices = @transform_2, window_bounds = array<i64: 1, 8, 128>}, {transform_indices = @transform_3, window_bounds = array<i64: 1, 1, 8, 128>}]} {
    %c0_i32 = arith.constant 0 : i32
    %0 = arith.cmpi eq, %arg2, %c0_i32 : i32
    %1 = arith.extui %0 : i1 to i32
    %c0_i32_0 = arith.constant 0 : i32
    %2 = arith.cmpi ne, %1, %c0_i32_0 : i32
    scf.if %2 {
      %cst_15 = arith.constant 0.000000e+00 : f32
      %30 = vector.broadcast %cst_15 : f32 to vector<1x1x8x128xf32>
      %c0_16 = arith.constant 0 : index
      %c0_17 = arith.constant 0 : index
      %c0_18 = arith.constant 0 : index
      %c0_19 = arith.constant 0 : index
      %31 = vector.load %arg6[%c0_16, %c0_17, %c0_18, %c0_19] : memref<1x1x8x128xf32, #tpu.memory_space<vmem>>, vector<1x1x8x128xf32>
      tpu.vector_store %arg6[%c0_16, %c0_17, %c0_18, %c0_19], %30 {strides = array<i32>} : memref<1x1x8x128xf32, #tpu.memory_space<vmem>>, vector<1x1x8x128xf32>,
    } else {
    }
    %3 = arith.index_cast %arg0 : i32 to index
    %4 = memref.load %arg3[%3] : memref<2xf32, #tpu.memory_space<smem>>
    %cst = arith.constant 0.000000e+00 : f32
    %5 = vector.broadcast %cst : f32 to vector<8x128xf32>
    %c0_i32_1 = arith.constant 0 : i32
    %c8_i32 = arith.constant 8 : i32
    %6 = arith.muli %c0_i32_1, %c8_i32 : i32
    %7 = tpu.assume_multiple %6, 8 : i32
    %c0 = arith.constant 0 : index
    %8 = arith.index_cast %7 : i32 to index
    %c0_2 = arith.constant 0 : index
    %9 = vector.load %arg4[%c0, %8, %c0_2] : memref<1x8x128xf32, #tpu.memory_space<vmem>>, vector<1x8x128xf32>
    %10 = vector.shape_cast %9 : vector<1x8x128xf32> to vector<8x128xf32>
    %c0_3 = arith.constant 0 : index
    %11 = arith.index_cast %7 : i32 to index
    %c0_4 = arith.constant 0 : index
    %12 = vector.load %arg5[%c0_3, %11, %c0_4] : memref<1x8x128xf32, #tpu.memory_space<vmem>>, vector<1x8x128xf32>
    %13 = vector.shape_cast %12 : vector<1x8x128xf32> to vector<8x128xf32>
    %14 = arith.subf %10, %13 : vector<8x128xf32>
    %15 = math.absf %14 : vector<8x128xf32>
    %16 = arith.mulf %14, %14 : vector<8x128xf32>
    %17 = vector.broadcast %4 : f32 to vector<8x128xf32>
    %18 = arith.mulf %16, %17 : vector<8x128xf32>
    %19 = math.exp %18 : vector<8x128xf32>
    %cst_5 = arith.constant 1.000000e+00 : f32
    %20 = vector.broadcast %cst_5 : f32 to vector<8x128xf32>
    %21 = arith.subf %20, %19 : vector<8x128xf32>
    %22 = arith.mulf %15, %21 : vector<8x128xf32>
    %23 = vector.shape_cast %22 : vector<8x128xf32> to vector<1x8x128xf32>
    %cst_6 = arith.constant dense<0.000000e+00> : vector<8x128xf32>
    %24 = vector.multi_reduction <add>, %23, %cst_6 [0] : vector<1x8x128xf32> to vector<8x128xf32>
    %25 = arith.addf %5, %24 : vector<8x128xf32>
    %c1_i32 = arith.constant 1 : i32
    %c0_7 = arith.constant 0 : index
    %c0_8 = arith.constant 0 : index
    %c0_9 = arith.constant 0 : index
    %c0_10 = arith.constant 0 : index
    %26 = vector.load %arg6[%c0_7, %c0_8, %c0_9, %c0_10] : memref<1x1x8x128xf32, #tpu.memory_space<vmem>>, vector<1x1x8x128xf32>
    %27 = vector.shape_cast %25 : vector<8x128xf32> to vector<1x1x8x128xf32>
    %28 = arith.addf %26, %27 : vector<1x1x8x128xf32>
    %c0_11 = arith.constant 0 : index
    %c0_12 = arith.constant 0 : index
    %c0_13 = arith.constant 0 : index
    %c0_14 = arith.constant 0 : index
    %29 = vector.load %arg6[%c0_11, %c0_12, %c0_13, %c0_14] : memref<1x1x8x128xf32, #tpu.memory_space<vmem>>, vector<1x1x8x128xf32>
    tpu.vector_store %arg6[%c0_11, %c0_12, %c0_13, %c0_14], %28 {strides = array<i32>} : memref<1x1x8x128xf32, #tpu.memory_space<vmem>>, vector<1x1x8x128xf32>,
    return
  }
  func.func @transform_0(%arg0: i32, %arg1: i32, %arg2: i32) -> i32 {
    %c0_i32 = arith.constant 0 : i32
    %c0_i32_0 = arith.constant 0 : i32
    return %c0_i32 : i32
  }
  func.func @transform_1(%arg0: i32, %arg1: i32, %arg2: i32) -> (i32, i32, i32) {
    %c1_i32 = arith.constant 1 : i32
    %0 = arith.muli %arg1, %c1_i32 : i32
    %1 = arith.addi %0, %arg2 : i32
    %c0_i32 = arith.constant 0 : i32
    %2 = arith.minsi %1, %c0_i32 : i32
    %c0_i32_0 = arith.constant 0 : i32
    %c0_i32_1 = arith.constant 0 : i32
    return %arg0, %2, %c0_i32_0 : i32, i32, i32
  }
  func.func @transform_2(%arg0: i32, %arg1: i32, %arg2: i32) -> (i32, i32, i32) {
    %c1_i32 = arith.constant 1 : i32
    %0 = arith.muli %arg1, %c1_i32 : i32
    %1 = arith.addi %0, %arg2 : i32
    %c0_i32 = arith.constant 0 : i32
    %2 = arith.minsi %1, %c0_i32 : i32
    %c0_i32_0 = arith.constant 0 : i32
    %c0_i32_1 = arith.constant 0 : i32
    return %arg0, %2, %c0_i32_0 : i32, i32, i32
  }
  func.func @transform_3(%arg0: i32, %arg1: i32, %arg2: i32) -> (i32, i32, i32, i32) {
    %c0_i32 = arith.constant 0 : i32
    %c0_i32_0 = arith.constant 0 : i32
    %c0_i32_1 = arith.constant 0 : i32
    return %arg0, %arg1, %c0_i32, %c0_i32_0 : i32, i32, i32, i32
  }
}

</mosaic_0001>

<llo_original>
// kernel: tpu_custom_call.1
$region0: #{tpu_custom_call.1}
  #allocation0 [shape = 'u32[]', space=smem, size = 0x4, offset = 0x4, fixed_abs, tag = 'smem constant byte address 0x4 - core index']
  #allocation1 [shape = 'u32[144,128]{1,0:T(1,128)}', space=vmem, size = 0x12000, scoped, tag = 'internal scratch']
  %s0 = inlined_call_operand.hbm [shape: f32[2], index: 0, kind: input, shape index: {}]
  %s1 = inlined_call_operand.hbm [shape: f32[2,8,128], index: 1, kind: input, shape index: {}]
  %s2 = inlined_call_operand.hbm [shape: f32[2,8,128], index: 2, kind: input, shape index: {}]
  %s3 = inlined_call_operand.hbm [shape: f32[2,1,8,128], index: 3, kind: output, shape index: {}]
  %s4 = sld [smem:[#allocation0]]
  $region61: #{tpu_custom_call.1} parent=0
    _
  %s6 = ssub.s32 1, %s4
  %s7 = scalar_select 0, %s6, %s4
  $region1: #{tpu_custom_call.1} parent=0
    #allocation2 [shape = 'u8[512]{0}', space=smem, size = 0x200, scoped, tag = 'input window, operand 0, single buffered']
    #allocation3 [shape = 's32[2]{0}', space=sflag, size = 0x8, scoped, tag = 'scoped memory for tpu_custom_call.1']
    #allocation4 [shape = 's32[2]{0}', space=sflag, size = 0x8, scoped, tag = 'scoped memory for tpu_custom_call.1']
    #allocation5 [shape = 's32[2]{0}', space=sflag, size = 0x8, scoped, tag = 'scoped memory for tpu_custom_call.1']
    #allocation6 [shape = 'u8[8192]{0}', space=vmem, size = 0x2000, scoped, tag = 'input window, operand 1']
    #allocation7 [shape = 'u8[8192]{0}', space=vmem, size = 0x2000, scoped, tag = 'input window, operand 2']
    #allocation8 [shape = 's32[2]{0}', space=sflag, size = 0x8, scoped, tag = 'scoped memory for tpu_custom_call.1']
    #allocation9 [shape = 'u8[8192]{0}', space=vmem, size = 0x2000, scoped, tag = 'output window, operand 0']
    %8 = vsyncpa [#allocation5], 0
    %9 = vsyncpa [#allocation3], 0
    %s10 = scalar_lea.sflag [#allocation3], 1
    %11 = vsyncpa %s10, 0
    %12 = vsyncpa [#allocation8], 0
    %s13 = scalar_lea.sflag [#allocation8], 1
    %14 = vsyncpa %s13, 0
    %15 = vsyncpa [#allocation4], 0
    %s16 = scalar_lea.sflag [#allocation4], 1
    %17 = vsyncpa %s16, 0
    loop: start=0, step=1, limit=4
    $region2: #{tpu_custom_call.1} parent=1 // loop_pre_header
      _
    $region3: #{tpu_custom_call.1} parent=1 // loop_header
      %s19 = sphi 0, %s23
      %p20 = scmp.ge.s32.totalorder %s19, 4
      %s26 = sphi 0, %s45
      %s27 = sphi 0, %s41
      %s28 = sphi 0, %s37
      %s29 = sphi 0, %s26
      %s30 = sphi 0, %s27
      %s31 = sphi 0, %s28
      %s32 = sphi 0, %s29
      %s33 = sphi 0, %s30
      %s34 = sphi 0, %s31
      %s46 = sphi 0, %s46
      %s48 = sphi 0, %s46
      %s49 = sphi 0, %s48
      %s63 = sphi 0, %s49
      %s77 = sphi 0, %s79
      %s80 = sphi 0, %s77
      %s81 = sphi 0, %s80
      %s97 = sphi 0, %s81
      %s111 = sphi 0, %s113
      %s114 = sphi 0, %s111
      %s115 = sphi 0, %s114
      %s131 = sphi 0, %s115
      %s139 = sphi 0, %s141
      %s142 = sphi 0, %s139
      %s143 = sphi 0, %s142
      %s159 = sphi 0, %s143
    $region4: #{tpu_custom_call.1} parent=1 // loop_header_branch
      %22 = sbr.rel (%p20) target = $region8
    $region5: #{tpu_custom_call.1} parent=1 // loop_body
      %s24 = ssub.s32 %s19, 1
      %s25 = ssub.s32 %s19, 2
      %s35 = sadd.s32 1, %s28
      %p36 = scmp.ge.s32.totalorder %s35, 1
      %s37 = scalar_select %p36, 0, %s35
      %s38 = sadd.s32 1, %s27
      %s39 = scalar_select %p36, %s38, %s27
      %p40 = scmp.ge.s32.totalorder %s39, 1
      %s41 = scalar_select %p40, 0, %s39
      %s42 = sadd.s32 1, %s26
      %s43 = scalar_select %p40, %s42, %s26
      %p44 = scmp.ge.s32.totalorder %s43, 2
      %s45 = scalar_select %p44, 0, %s43
      %s47 = sadd.s32 %s46, 1
      %p50 = scmp.eq.s32.totalorder %s19, 1
      %p51 = scmp.ne.s32.totalorder %s46, %s48
      %p52 = scmp.eq.s32.totalorder %s19, 0
      %p53 = por %p51, %p52
      %p54 = scmp.ne.s32.totalorder %s46, %s48
      %p55 = scmp.eq.s32.totalorder %s24, 1
      %p56 = por %p54, %p55
      %p57 = scmp.ne.s32.totalorder %s48, %s49
      %p58 = scmp.eq.s32.totalorder %s24, 0
      %p59 = por %p57, %p58
      %p60 = scmp.ne.s32.totalorder %s48, %s49
      %p61 = scmp.eq.s32.totalorder %s25, 1
      %p62 = por %p60, %p61
      %p64 = scmp.ne.s32.totalorder %s49, %s63
      %p65 = scmp.eq.s32.totalorder %s25, 0
      %p66 = por %p64, %p65
      %s67 = sadd.s32 %s27, %s28
      %p68 = scmp.lt.s32.totalorder %s67, 0
      %s69 = scalar_select %p68, %s67, 0
      %s70 = sadd.s32 %s41, %s37
      %p71 = scmp.lt.s32.totalorder %s70, 0
      %s72 = scalar_select %p71, %s70, 0
      %s73 = ssub.s32 %s26, %s45
      %s74 = ssub.s32 %s69, %s72
      %s75 = sor.u32 %s73, %s74
      %p76 = scmp.eq.s32.totalorder %s75, 0
      %s78 = sadd.s32 %s77, 1
      %s79 = scalar_select %p76, %s77, %s78
      %p82 = pneg %p76
      %p83 = scmp.eq.s32.totalorder %s19, 1
      %p84 = por %p82, %p83
      %p85 = scmp.ne.s32.totalorder %s77, %s80
      %p86 = scmp.eq.s32.totalorder %s19, 0
      %p87 = por %p85, %p86
      %p88 = scmp.ne.s32.totalorder %s77, %s80
      %p89 = scmp.eq.s32.totalorder %s24, 1
      %p90 = por %p88, %p89
      %p91 = scmp.ne.s32.totalorder %s80, %s81
      %p92 = scmp.eq.s32.totalorder %s24, 0
      %p93 = por %p91, %p92
      %p94 = scmp.ne.s32.totalorder %s80, %s81
      %p95 = scmp.eq.s32.totalorder %s25, 1
      %p96 = por %p94, %p95
      %p98 = scmp.ne.s32.totalorder %s81, %s97
      %p99 = scmp.eq.s32.totalorder %s25, 0
      %p100 = por %p98, %p99
      %s101 = sadd.s32 %s27, %s28
      %p102 = scmp.lt.s32.totalorder %s101, 0
      %s103 = scalar_select %p102, %s101, 0
      %s104 = sadd.s32 %s41, %s37
      %p105 = scmp.lt.s32.totalorder %s104, 0
      %s106 = scalar_select %p105, %s104, 0
      %s107 = ssub.s32 %s26, %s45
      %s108 = ssub.s32 %s103, %s106
      %s109 = sor.u32 %s107, %s108
      %p110 = scmp.eq.s32.totalorder %s109, 0
      %s112 = sadd.s32 %s111, 1
      %s113 = scalar_select %p110, %s111, %s112
      %p116 = pneg %p110
      %p117 = scmp.eq.s32.totalorder %s19, 1
      %p118 = por %p116, %p117
      %p119 = scmp.ne.s32.totalorder %s111, %s114
      %p120 = scmp.eq.s32.totalorder %s19, 0
      %p121 = por %p119, %p120
      %p122 = scmp.ne.s32.totalorder %s111, %s114
      %p123 = scmp.eq.s32.totalorder %s24, 1
      %p124 = por %p122, %p123
      %p125 = scmp.ne.s32.totalorder %s114, %s115
      %p126 = scmp.eq.s32.totalorder %s24, 0
      %p127 = por %p125, %p126
      %p128 = scmp.ne.s32.totalorder %s114, %s115
      %p129 = scmp.eq.s32.totalorder %s25, 1
      %p130 = por %p128, %p129
      %p132 = scmp.ne.s32.totalorder %s115, %s131
      %p133 = scmp.eq.s32.totalorder %s25, 0
      %p134 = por %p132, %p133
      %s135 = ssub.s32 %s26, %s45
      %s136 = ssub.s32 %s27, %s41
      %s137 = sor.u32 %s135, %s136
      %p138 = scmp.eq.s32.totalorder %s137, 0
      %s140 = sadd.s32 %s139, 1
      %s141 = scalar_select %p138, %s139, %s140
      %p144 = pneg %p138
      %p145 = scmp.eq.s32.totalorder %s19, 1
      %p146 = por %p144, %p145
      %p147 = scmp.ne.s32.totalorder %s139, %s142
      %p148 = scmp.eq.s32.totalorder %s19, 0
      %p149 = por %p147, %p148
      %p150 = scmp.ne.s32.totalorder %s139, %s142
      %p151 = scmp.eq.s32.totalorder %s24, 1
      %p152 = por %p150, %p151
      %p153 = scmp.ne.s32.totalorder %s142, %s143
      %p154 = scmp.eq.s32.totalorder %s24, 0
      %p155 = por %p153, %p154
      %p156 = scmp.ne.s32.totalorder %s142, %s143
      %p157 = scmp.eq.s32.totalorder %s25, 1
      %p158 = por %p156, %p157
      %p160 = scmp.ne.s32.totalorder %s143, %s159
      %p161 = scmp.eq.s32.totalorder %s25, 0
      %p162 = por %p160, %p161
      %p163 = scmp.le.s32.totalorder 1, %s19
      %p164 = scmp.lt.s32.totalorder %s19, 3
      %p165 = pnand %p163, %p164
      %p166 = pneg %p165
      // Predicated region
      $region9: #{tpu_custom_call.1} parent=5 // pred_check
        _
      $region10: #{tpu_custom_call.1} parent=5 // pred_check_branch
        %168 = sbr.rel (%p165) target = $region12
      $region11: #{tpu_custom_call.1} parent=5 // pred_region
        %s169 = ssub.s32 %s19, 1
        // Predicated region
        $region13: #{tpu_custom_call.1} parent=11 // pred_check
          %p170 = pneg %p59
        $region14: #{tpu_custom_call.1} parent=11 // pred_check_branch
          %172 = sbr.rel (%p170) target = $region16
        $region15: #{tpu_custom_call.1} parent=11 // pred_region
          %s174 = ssub.s32 16, 16
          %175 = vsyncadd [#allocation5], %s174
          %178 = dma.hbm_to_smem %s0, 16, [#allocation2], [#allocation5]
        $region16: #{tpu_custom_call.1} parent=11 // pred_fallthru
          _
      $region12: #{tpu_custom_call.1} parent=5 // pred_fallthru
        _
      %p179 = scmp.lt.s32.totalorder %s19, 2
      // Predicated region
      $region17: #{tpu_custom_call.1} parent=5 // pred_check
        %p180 = pneg %p179
      $region18: #{tpu_custom_call.1} parent=5 // pred_check_branch
        %182 = sbr.rel (%p180) target = $region20
      $region19: #{tpu_custom_call.1} parent=5 // pred_region
        // Predicated region
        $region21: #{tpu_custom_call.1} parent=19 // pred_check
          %p183 = pneg %p87
        $region22: #{tpu_custom_call.1} parent=19 // pred_check_branch
          %185 = sbr.rel (%p183) target = $region24
        $region23: #{tpu_custom_call.1} parent=19 // pred_region
          %s186 = sand.u32 %s77, 1
          %s187 = scalar_lea.sflag [#allocation3], %s186
          %s188 = sand.u32 %s77, 1
          %s189 = smul.addr %s188, 8
          %s190 = scalar_lea.vmem [#allocation6], %s189
          %s191 = sadd.s32 %s27, %s28
          %p192 = scmp.lt.s32.totalorder %s191, 0
          %s193 = scalar_select %p192, %s191, 0
          %s195 = ssub.s32 128, 128
          %196 = vsyncadd %s187, %s195
          %s197 = sadd.s32 %s193, %s26
          %s198 = smul.addr %s197, 128
          %s199 = scalar_lea.hbm %s1, %s198
          %s201 = sshll.u32 %s190, 4
          %s202 = int_to_ptr.vmem [resolvable:$true] %s201
          %204 = dma.hbm_to_vmem [thread:$0]  %s199, 128, %s202, %s187
        $region24: #{tpu_custom_call.1} parent=19 // pred_fallthru
          _
        // Predicated region
        $region25: #{tpu_custom_call.1} parent=19 // pred_check
          %p205 = pneg %p121
        $region26: #{tpu_custom_call.1} parent=19 // pred_check_branch
          %207 = sbr.rel (%p205) target = $region28
        $region27: #{tpu_custom_call.1} parent=19 // pred_region
          %s208 = sand.u32 %s111, 1
          %s209 = scalar_lea.sflag [#allocation8], %s208
          %s210 = sand.u32 %s111, 1
          %s211 = smul.addr %s210, 8
          %s212 = scalar_lea.vmem [#allocation7], %s211
          %s213 = sadd.s32 %s27, %s28
          %p214 = scmp.lt.s32.totalorder %s213, 0
          %s215 = scalar_select %p214, %s213, 0
          %s217 = ssub.s32 128, 128
          %218 = vsyncadd %s209, %s217
          %s219 = sadd.s32 %s215, %s26
          %s220 = smul.addr %s219, 128
          %s221 = scalar_lea.hbm %s2, %s220
          %s223 = sshll.u32 %s212, 4
          %s224 = int_to_ptr.vmem [resolvable:$true] %s223
          %226 = dma.hbm_to_vmem [thread:$0]  %s221, 128, %s224, %s209
        $region28: #{tpu_custom_call.1} parent=19 // pred_fallthru
          _
      $region20: #{tpu_custom_call.1} parent=5 // pred_fallthru
        _
      %p227 = scmp.le.s32.totalorder 1, %s19
      %p228 = scmp.lt.s32.totalorder %s19, 3
      %p229 = pnand %p227, %p228
      %p230 = pneg %p229
      // Predicated region
      $region29: #{tpu_custom_call.1} parent=5 // pred_check
        _
      $region30: #{tpu_custom_call.1} parent=5 // pred_check_branch
        %232 = sbr.rel (%p229) target = $region32
      $region31: #{tpu_custom_call.1} parent=5 // pred_region
        %s233 = ssub.s32 %s19, 1
        // Predicated region
        $region33: #{tpu_custom_call.1} parent=31 // pred_check
          %p234 = pneg %p59
        $region34: #{tpu_custom_call.1} parent=31 // pred_check_branch
          %236 = sbr.rel (%p234) target = $region36
        $region35: #{tpu_custom_call.1} parent=31 // pred_region
          %237 = dma.done [#allocation5], 16
        $region36: #{tpu_custom_call.1} parent=31 // pred_fallthru
          _
        %s238 = sand.u32 %s80, 1
        %s239 = scalar_lea.sflag [#allocation3], %s238
        %s240 = sand.u32 %s80, 1
        %s241 = smul.addr %s240, 8
        %s242 = scalar_lea.vmem [#allocation6], %s241
        // Predicated region
        $region37: #{tpu_custom_call.1} parent=31 // pred_check
          %p243 = pneg %p93
        $region38: #{tpu_custom_call.1} parent=31 // pred_check_branch
          %245 = sbr.rel (%p243) target = $region40
        $region39: #{tpu_custom_call.1} parent=31 // pred_region
          %246 = dma.done %s239, 128
        $region40: #{tpu_custom_call.1} parent=31 // pred_fallthru
          _
        %s247 = sand.u32 %s114, 1
        %s248 = scalar_lea.sflag [#allocation8], %s247
        %s249 = sand.u32 %s114, 1
        %s250 = smul.addr %s249, 8
        %s251 = scalar_lea.vmem [#allocation7], %s250
        // Predicated region
        $region41: #{tpu_custom_call.1} parent=31 // pred_check
          %p252 = pneg %p127
        $region42: #{tpu_custom_call.1} parent=31 // pred_check_branch
          %254 = sbr.rel (%p252) target = $region44
        $region43: #{tpu_custom_call.1} parent=31 // pred_region
          %255 = dma.done %s248, 128
        $region44: #{tpu_custom_call.1} parent=31 // pred_fallthru
          _
        %256 = sfence
        %p257 = pneg %p59
        %p258 = pneg %p56
        %s259 = sand.u32 %s80, 1
        %s260 = scalar_lea.sflag [#allocation3], %s259
        %s261 = sand.u32 %s80, 1
        %s262 = smul.addr %s261, 8
        %s263 = scalar_lea.vmem [#allocation6], %s262
        %p264 = pneg %p93
        %p265 = pneg %p90
        %s266 = sand.u32 %s114, 1
        %s267 = scalar_lea.sflag [#allocation8], %s266
        %s268 = sand.u32 %s114, 1
        %s269 = smul.addr %s268, 8
        %s270 = scalar_lea.vmem [#allocation7], %s269
        %p271 = pneg %p127
        %p272 = pneg %p124
        %p273 = pneg %p155
        %p274 = pneg %p152
        %s275 = sand.u32 %s142, 1
        %s276 = scalar_lea.sflag [#allocation4], %s275
        %s277 = sand.u32 %s142, 1
        %s278 = smul.addr %s277, 8
        %s279 = scalar_lea.vmem [#allocation9], %s278
        %s280 = sadd.s32 %s30, %s31
        %p281 = scmp.lt.s32.totalorder %s280, 0
        %s282 = scalar_select %p281, %s280, 0
        %s283 = sadd.s32 %s30, %s31
        %p284 = scmp.lt.s32.totalorder %s283, 0
        %s285 = scalar_select %p284, %s283, 0
        %p286 = scmp.eq.s32.totalorder %s31, 0
        // Predicated region
        $region45: #{tpu_custom_call.1} parent=31 // pred_check
          %p287 = pneg %p286
        $region46: #{tpu_custom_call.1} parent=31 // pred_check_branch
          %289 = sbr.rel (%p287) target = $region48
        $region47: #{tpu_custom_call.1} parent=31 // pred_region
          %290 = vst [vmem:[%s279] sm:$0xff] 0.0
        $region48: #{tpu_custom_call.1} parent=31 // pred_fallthru
          _
        %s291 = sld [smem:[#allocation2 + %s29]]
        %v292 = vld [vmem:[%s242] sm:$0xff]
        %v293 = vld [vmem:[%s251] sm:$0xff]
        %v294 = vsub.f32 %v292, %v293
        %v295 = vand.u32 2147483647, %v294
        %v296 = vmul.f32 %v294, %v294
        %v297 = vstv %s291
        %v298 = vmul.f32 %v296, %v297
        %v299 = vmul.f32 %v298, 1.442695
        %v300 = vpow.pop %v299
        %v301 = vsub.f32 1.0, %v300
        %v302 = vmul.f32 %v295, %v301
        %v303 = vadd.f32 %v302, 0.0
        %v304 = vadd.f32 %v303, 0.0
        %v305 = vld [vmem:[%s279] sm:$0xff]
        %v306 = vadd.f32 %v305, %v304
        %307 = vst [vmem:[%s279] sm:$0xff] %v306
        %s308 = sand.u32 %s142, 1
        %s309 = scalar_lea.sflag [#allocation4], %s308
        %s310 = sand.u32 %s142, 1
        %s311 = smul.addr %s310, 8
        %s312 = scalar_lea.vmem [#allocation9], %s311
        // Predicated region
        $region49: #{tpu_custom_call.1} parent=31 // pred_check
          %p313 = pneg %p152
        $region50: #{tpu_custom_call.1} parent=31 // pred_check_branch
          %315 = sbr.rel (%p313) target = $region52
        $region51: #{tpu_custom_call.1} parent=31 // pred_region
          %s317 = ssub.s32 128, 128
          %318 = vsyncadd %s309, %s317
          %s319 = sadd.s32 %s30, %s29
          %s320 = smul.addr %s319, 128
          %s321 = scalar_lea.hbm %s3, %s320
          %s323 = sshll.u32 %s312, 4
          %s324 = int_to_ptr.vmem [resolvable:$true] %s323
          %326 = dma.vmem_to_hbm [thread:$0]  %s324, 128, %s321, %s309
        $region52: #{tpu_custom_call.1} parent=31 // pred_fallthru
          _
      $region32: #{tpu_custom_call.1} parent=5 // pred_fallthru
        _
      %p327 = scmp.le.s32.totalorder 2, %s19
      // Predicated region
      $region53: #{tpu_custom_call.1} parent=5 // pred_check
        %p328 = pneg %p327
      $region54: #{tpu_custom_call.1} parent=5 // pred_check_branch
        %330 = sbr.rel (%p328) target = $region56
      $region55: #{tpu_custom_call.1} parent=5 // pred_region
        %s331 = ssub.s32 %s19, 2
        // Predicated region
        $region57: #{tpu_custom_call.1} parent=55 // pred_check
          %p332 = pneg %p158
        $region58: #{tpu_custom_call.1} parent=55 // pred_check_branch
          %334 = sbr.rel (%p332) target = $region60
        $region59: #{tpu_custom_call.1} parent=55 // pred_region
          %s335 = sand.u32 %s143, 1
          %s336 = scalar_lea.sflag [#allocation4], %s335
          %s337 = sand.u32 %s143, 1
          %s338 = smul.addr %s337, 8
          %s339 = scalar_lea.vmem [#allocation9], %s338
          %340 = dma.done %s336, 128
        $region60: #{tpu_custom_call.1} parent=55 // pred_fallthru
          _
      $region56: #{tpu_custom_call.1} parent=5 // pred_fallthru
        _
    $region6: #{tpu_custom_call.1} parent=1 // loop_footer
      %s23 = sadd.s32 1, %s19
    $region7: #{tpu_custom_call.1} parent=1 // loop_footer_branch
      %18 = sbr.rel target = $region3
    $region8: #{tpu_custom_call.1} parent=1 // loop_exit
      _
    %341 = vsyncpa [#allocation3], 1
    %s342 = scalar_lea.sflag [#allocation3], 1
    %343 = vsyncpa %s342, 1
    %344 = vsyncpa [#allocation8], 1
    %s345 = scalar_lea.sflag [#allocation8], 1
    %346 = vsyncpa %s345, 1
    %347 = vsyncpa [#allocation4], 1
    %s348 = scalar_lea.sflag [#allocation4], 1
    %349 = vsyncpa %s348, 1
    %350 = vsyncpa [#allocation5], 1
    %s351 = scalar_lea.sflag [#allocation5], 1
    %352 = vsyncpa %s351, 1

</llo_original>
